<compile_context>
chip_gen: v6e
topology: v6e:2x2x1
jax: 0.10.0
libtpu: 0.0.40
codegen_flags: <defaults>
</compile_context>

<pallas_src>
import jax
import jax.numpy as jnp
from jax.experimental import pallas as pl
from jax.experimental.pallas import tpu as pltpu

# cfg.MODEL.EMBEDDING.EPSILON and the module's fixed scales.
EPSILON = 0.1
SCALE_POS = 10.0
SCALE_NEG = 40.0
ALPHA = 0.6
BETA = 0.4

# Class-tile width used when NUM_CLASSES is large.  Must be a multiple of 128
# (or equal to the full class count).  bf16 projection tile (D, 512) with
# D ~ 2k is 2 MiB per buffer (4 MiB double-buffered).
_MAX_CLASS_TILE = 512


def _make_loss_kernel(B, C, TC):
    """Build the kernel for a fixed (batch, num_classes, class_tile)."""
    eps = EPSILON
    needs_mask = (C % TC) != 0  # partial last class tile -> mask garbage lanes

    def kernel(emb_ref, proj_ref, labc_ref, labr_ref, out_ref,
               m_sc, l_sc, dot_sc):
        c_idx = pl.program_id(0)
        nc = pl.num_programs(0)

        @pl.when(c_idx == 0)
        def _init():
            m_sc[...] = jnp.full(m_sc.shape, -jnp.inf, m_sc.dtype)
            l_sc[...] = jnp.zeros(l_sc.shape, l_sc.dtype)
            dot_sc[...] = jnp.zeros(dot_sc.shape, dot_sc.dtype)

        emb = emb_ref[...]                      # (2B, D) bf16  [visual ; textual]
        proj = proj_ref[...]                    # (D, TC) bf16  class tile
        labc = labc_ref[...]                    # (B, 1)  int32

        # F.normalize(projection, p=2, dim=0) folded into a post-matmul (1,TC)
        # rsqrt column scale (eps-guard equivalent to max(norm, 1e-12)).
        proj32 = proj.astype(jnp.float32)
        inv_col = jax.lax.rsqrt(
            jnp.maximum(jnp.sum(proj32 * proj32, axis=0, keepdims=True), 1e-24))

        # bf16 x bf16 MXU matmul, f32 accumulation.
        raw = jnp.dot(emb, proj, preferred_element_type=jnp.float32)   # (2B, TC)
        logits = raw * inv_col

        # Global class index of each lane of this tile.
        lane_cls = jax.lax.broadcasted_iota(jnp.int32, (1, TC), 1) + c_idx * TC

        if needs_mask:
            valid = lane_cls < C                                       # (1, TC)
            logits_lse = jnp.where(valid, logits, -jnp.inf)
        else:
            logits_lse = logits

        # ---- online LSE over class tiles (per row of the stacked logits) ----
        m_tile = jnp.max(logits_lse, axis=-1, keepdims=True)           # (2B, 1)
        m_new = jnp.maximum(m_sc[...], m_tile)
        l_sc[...] = (l_sc[...] * jnp.exp(m_sc[...] - m_new)
                     + jnp.sum(jnp.exp(logits_lse - m_new), axis=-1, keepdims=True))
        m_sc[...] = m_new

        # ---- running sum_c smooth(c) * logits(c) ----------------------------
        # visual + textual rows share the same labels, so fold them first:
        #   sum(smooth*logits) = (1-eps)*sum(logit at label) + (eps/C)*sum(logits)
        lv = logits[:B, :]
        lt = logits[B:, :]
        pair = lv + lt                                                 # (B, TC)
        sel = lane_cls == labc                                         # (B, TC)
        if needs_mask:
            pair_all = jnp.where(valid, pair, 0.0)
        else:
            pair_all = pair
        dot_sc[...] += ((1.0 - eps) * jnp.sum(jnp.where(sel, pair, 0.0),
                                              axis=-1, keepdims=True)
                        + (eps / C) * jnp.sum(pair_all, axis=-1, keepdims=True))

        # ---- finalize on the last class tile --------------------------------
        @pl.when(c_idx == nc - 1)
        def _finalize():
            # instance loss: rows of the smoothed target sum to 1, so
            # CE = (sum_rows lse - sum smooth*logits) / B.
            lse = m_sc[...] + jnp.log(l_sc[...])                       # (2B, 1)
            inst = (jnp.sum(lse) - jnp.sum(dot_sc[...])) / B

            # global align loss: row L2 norms folded into rsqrt scales, then a
            # bf16 NT matmul (contraction on dim 1 of both operands).
            emb32 = emb.astype(jnp.float32)
            inv_row = jax.lax.rsqrt(
                jnp.maximum(jnp.sum(emb32 * emb32, axis=-1, keepdims=True), 1e-24))
            emb_n = emb32 * inv_row
            vn = emb_n[:B, :].astype(jnp.bfloat16)
            tn = emb_n[B:, :].astype(jnp.bfloat16)
            sim = jax.lax.dot_general(
                vn, tn, dimension_numbers=(((1,), (1,)), ((), ())),
                preferred_element_type=jnp.float32)                    # (B, B)

            pos = labc == labr_ref[...]                                # (B, B)
            # fused branch: one stable softplus over the selected argument.
            x = jnp.where(pos, -SCALE_POS * (sim - ALPHA),
                          SCALE_NEG * (sim - BETA))
            sp = jnp.maximum(x, 0.0) + jnp.log(1.0 + jnp.exp(-jnp.abs(x)))
            ga = jnp.sum(sp) * (2.0 / B)

            # single (1, 2) output slab: [instance_loss, global_align_loss]
            lane = jax.lax.broadcasted_iota(jnp.int32, (1, 2), 1)
            out_ref[...] = jnp.where(lane == 0, inst, ga)

    return kernel


def loss_computation(projection, visual_embed, textual_embed, labels, *,
                     class_tile=_MAX_CLASS_TILE):
    """Wrapper: bf16 casts, modality stacking, class-tiled pallas_call."""
    D, C = projection.shape
    B, _ = visual_embed.shape
    labels = labels.astype(jnp.int32)

    # Stack modalities -> one (2B,D)@(D,TC) matmul and one shared LSE pass.
    # bf16 MXU operands; all accumulation / norm math stays f32 in the kernel.
    # (Keep B a multiple of 8 so the f32 [:B]/[B:] slices stay tile-aligned.)
    emb = jnp.concatenate([visual_embed, textual_embed], axis=0).astype(jnp.bfloat16)
    proj = projection.astype(jnp.bfloat16)
    lab_col = labels.reshape(B, 1)
    lab_row = labels.reshape(1, B)

    # Class tile: full C when small, otherwise a 128-multiple tile; the kernel
    # masks the padded lanes of a partial last tile.
    TC = C if C <= class_tile else class_tile
    nc = pl.cdiv(C, TC)

    cost = pl.CostEstimate(
        flops=2 * (2 * B) * D * C + 2 * B * B * D,
        transcendentals=(2 * B) * C + 2 * B * B,
        bytes_accessed=(D * C + 2 * B * D) * 2 + 2 * B * 4 + 2 * 4,
    )

    kernel = _make_loss_kernel(B, C, TC)
    out = pl.pallas_call(
        kernel,
        out_shape=jax.ShapeDtypeStruct((1, 2), jnp.float32),
        grid=(nc,),
        in_specs=[
            pl.BlockSpec((2 * B, D), lambda c: (0, 0)),   # emb, VMEM-resident
            pl.BlockSpec((D, TC), lambda c: (0, c)),      # projection class tile
            pl.BlockSpec((B, 1), lambda c: (0, 0)),       # labels (column view)
            pl.BlockSpec((1, B), lambda c: (0, 0)),       # labels (row view)
        ],
        out_specs=pl.BlockSpec((1, 2), lambda c: (0, 0)),
        scratch_shapes=[
            pltpu.VMEM((2 * B, 1), jnp.float32),   # running row max
            pltpu.VMEM((2 * B, 1), jnp.float32),   # running row sum(exp)
            pltpu.VMEM((B, 1), jnp.float32),       # running sum(smooth*logits) per row-pair
        ],
        compiler_params=pltpu.CompilerParams(
            dimension_semantics=("arbitrary",),    # class axis is a reduction
        ),
        cost_estimate=cost,
    )(emb, proj, lab_col, lab_row)

    return {"instance_loss": out[0, 0], "global_align_loss": out[0, 1]}


def _reference(projection, visual_embed, textual_embed, labels, *, quantize):
    """Pure-JAX reference of the PyTorch losses.

    quantize=True rounds inputs / normalized embeddings to bf16 at the same
    points as the kernel, isolating kernel math from the intentional bf16 MXU
    quantization; quantize=False is the exact f32 PyTorch semantics.
    """
    B = visual_embed.shape[0]
    C = projection.shape[1]
    hp = jax.lax.Precision.HIGHEST
    if quantize:
        projection = projection.astype(jnp.bfloat16).astype(jnp.float32)
        visual_embed = visual_embed.astype(jnp.bfloat16).astype(jnp.float32)
        textual_embed = textual_embed.astype(jnp.bfloat16).astype(jnp.float32)

    proj_n = projection / jnp.maximum(
        jnp.sqrt(jnp.sum(projection ** 2, axis=0, keepdims=True)), 1e-12)
    vl = jnp.dot(visual_embed, proj_n, precision=hp)
    tl = jnp.dot(textual_embed, proj_n, precision=hp)
    one_hot = jax.nn.one_hot(labels, C, dtype=jnp.float32)
    smooth = (1.0 - EPSILON) * one_hot + EPSILON / C

    def ce(logits):
        lp = jax.nn.log_softmax(logits, axis=-1)
        return jnp.sum(-smooth * lp) / B

    inst = ce(vl) + ce(tl)

    vn = visual_embed / jnp.maximum(
        jnp.linalg.norm(visual_embed, axis=-1, keepdims=True), 1e-12)
    tn = textual_embed / jnp.maximum(
        jnp.linalg.norm(textual_embed, axis=-1, keepdims=True), 1e-12)
    if quantize:
        vn = vn.astype(jnp.bfloat16).astype(jnp.float32)
        tn = tn.astype(jnp.bfloat16).astype(jnp.float32)
    sim = jnp.dot(vn, tn.T, precision=hp)
    pos = (labels[:, None] == labels[None, :]).astype(jnp.float32)
    neg = 1.0 - pos
    lp_ = jnp.log(1.0 + jnp.exp(-SCALE_POS * (sim - ALPHA)))
    ln_ = jnp.log(1.0 + jnp.exp(SCALE_NEG * (sim - BETA)))
    ga = (jnp.sum(lp_ * pos) + jnp.sum(ln_ * neg)) * 2.0 / B
    return inst, ga


if __name__ == "__main__":
    # ---- test 1: tiny shapes, single class tile -----------------------------
    B = 8            # batch (labels come from caption.get_field('id'))
    D = 32           # cfg.MODEL.EMBEDDING.FEATURE_SIZE
    C = 16           # cfg.MODEL.NUM_CLASSES

    key = jax.random.PRNGKey(0)
    k_proj, k_vis, k_txt, k_lab, k_proj2, k_lab2 = jax.random.split(key, 6)

    # xavier_uniform_(projection, gain=1): U(-a, a), a = sqrt(6/(fan_in+fan_out))
    bound = (6.0 / (D + C)) ** 0.5
    projection = jax.random.uniform(k_proj, (D, C), jnp.float32, -bound, bound)
    visual_embed = jax.random.normal(k_vis, (B, D), jnp.float32)
    textual_embed = jax.random.normal(k_txt, (B, D), jnp.float32)
    labels = jax.random.randint(k_lab, (B,), 0, C, jnp.int32)

    out = loss_computation(projection, visual_embed, textual_embed, labels)
    jax.block_until_ready(out)

    # matched-precision reference (same bf16 quantization points as the kernel)
    ri_q, rg_q = _reference(projection, visual_embed, textual_embed, labels,
                            quantize=True)
    assert jnp.allclose(out["instance_loss"], ri_q, rtol=5e-3, atol=5e-3)
    assert jnp.allclose(out["global_align_loss"], rg_q, rtol=5e-3, atol=5e-3)

    # full-f32 PyTorch-semantics reference (loose tolerance absorbs the
    # intentional bf16 MXU quantization)
    ri, rg = _reference(projection, visual_embed, textual_embed, labels,
                        quantize=False)
    assert jnp.allclose(out["instance_loss"], ri, rtol=1e-1, atol=3e-1)
    assert jnp.allclose(out["global_align_loss"], rg, rtol=1e-1, atol=3e-1)

    # ---- test 2: exercise the multi-tile online-LSE path (partial last tile)
    C2 = 192
    bound2 = (6.0 / (D + C2)) ** 0.5
    projection2 = jax.random.uniform(k_proj2, (D, C2), jnp.float32, -bound2, bound2)
    labels2 = jax.random.randint(k_lab2, (B,), 0, C2, jnp.int32)

    out2 = loss_computation(projection2, visual_embed, textual_embed, labels2,
                            class_tile=128)   # -> 2 class tiles, last one masked
    jax.block_until_ready(out2)
    ri2, rg2 = _reference(projection2, visual_embed, textual_embed, labels2,
                          quantize=True)
    assert jnp.allclose(out2["instance_loss"], ri2, rtol=5e-3, atol=5e-3)
    assert jnp.allclose(out2["global_align_loss"], rg2, rtol=5e-3, atol=5e-3)

    print("KERNEL_OK")
</pallas_src>

<mosaic_0001>
module attributes {stable_mosaic.version = 11 : i64} {
  func.func @kernel(%arg0: i32, %arg1: memref<16x32xbf16, #tpu.memory_space<vmem>>, %arg2: memref<32x16xbf16, #tpu.memory_space<vmem>>, %arg3: memref<8x1xi32, #tpu.memory_space<vmem>>, %arg4: memref<1x8xi32, #tpu.memory_space<vmem>>, %arg5: memref<1x2xf32, #tpu.memory_space<vmem>>, %arg6: memref<16x1xf32, #tpu.memory_space<vmem>>, %arg7: memref<16x1xf32, #tpu.memory_space<vmem>>, %arg8: memref<8x1xf32, #tpu.memory_space<vmem>>) attributes {dimension_semantics = [#tpu.dimension_semantics<arbitrary>], iteration_bounds = array<i64: 1>, scalar_prefetch = 0 : i64, scratch_operands = 3 : i64, tpu.core_type = #tpu.core_type<tc>, window_params = [{pipeline_mode = #tpu.pipeline_mode<synchronous>, transform_indices = @transform_0, window_bounds = array<i64: 16, 32>}, {transform_indices = @transform_1, window_bounds = array<i64: 32, 16>}, {pipeline_mode = #tpu.pipeline_mode<synchronous>, transform_indices = @transform_2, window_bounds = array<i64: 8, 1>}, {pipeline_mode = #tpu.pipeline_mode<synchronous>, transform_indices = @transform_3, window_bounds = array<i64: 1, 8>}, {pipeline_mode = #tpu.pipeline_mode<synchronous>, transform_indices = @transform_4, window_bounds = array<i64: 1, 2>}]} {
    %c0_i32 = arith.constant 0 : i32
    %0 = arith.cmpi eq, %arg0, %c0_i32 : i32
    %1 = arith.extui %0 : i1 to i32
    %c0_i32_0 = arith.constant 0 : i32
    %2 = arith.cmpi ne, %1, %c0_i32_0 : i32
    scf.if %2 {
      %cst_31 = arith.constant 0xFF800000 : f32
      %60 = vector.broadcast %cst_31 : f32 to vector<16x1xf32>
      %c0_32 = arith.constant 0 : index
      %c0_33 = arith.constant 0 : index
      %61 = vector.load %arg6[%c0_32, %c0_33] : memref<16x1xf32, #tpu.memory_space<vmem>>, vector<16x1xf32>
      tpu.vector_store %arg6[%c0_32, %c0_33], %60 {strides = array<i32>} : memref<16x1xf32, #tpu.memory_space<vmem>>, vector<16x1xf32>,
      %cst_34 = arith.constant 0.000000e+00 : f32
      %62 = vector.broadcast %cst_34 : f32 to vector<16x1xf32>
      %c0_35 = arith.constant 0 : index
      %c0_36 = arith.constant 0 : index
      %63 = vector.load %arg7[%c0_35, %c0_36] : memref<16x1xf32, #tpu.memory_space<vmem>>, vector<16x1xf32>
      tpu.vector_store %arg7[%c0_35, %c0_36], %62 {strides = array<i32>} : memref<16x1xf32, #tpu.memory_space<vmem>>, vector<16x1xf32>,
      %cst_37 = arith.constant 0.000000e+00 : f32
      %64 = vector.broadcast %cst_37 : f32 to vector<8x1xf32>
      %c0_38 = arith.constant 0 : index
      %c0_39 = arith.constant 0 : index
      %65 = vector.load %arg8[%c0_38, %c0_39] : memref<8x1xf32, #tpu.memory_space<vmem>>, vector<8x1xf32>
      tpu.vector_store %arg8[%c0_38, %c0_39], %64 {strides = array<i32>} : memref<8x1xf32, #tpu.memory_space<vmem>>, vector<8x1xf32>,
    } else {
    }
    %c0 = arith.constant 0 : index
    %c0_1 = arith.constant 0 : index
    %3 = vector.load %arg1[%c0, %c0_1] : memref<16x32xbf16, #tpu.memory_space<vmem>>, vector<16x32xbf16>
    %c0_2 = arith.constant 0 : index
    %c0_3 = arith.constant 0 : index
    %4 = vector.load %arg2[%c0_2, %c0_3] : memref<32x16xbf16, #tpu.memory_space<vmem>>, vector<32x16xbf16>
    %c0_4 = arith.constant 0 : index
    %c0_5 = arith.constant 0 : index
    %5 = vector.load %arg3[%c0_4, %c0_5] : memref<8x1xi32, #tpu.memory_space<vmem>>, vector<8x1xi32>
    %6 = arith.extf %4 : vector<32x16xbf16> to vector<32x16xf32>
    %7 = arith.mulf %6, %6 : vector<32x16xf32>
    %cst = arith.constant dense<0.000000e+00> : vector<16xf32>
    %8 = vector.multi_reduction <add>, %7, %cst [0] : vector<32x16xf32> to vector<16xf32>
    %9 = vector.shape_cast %8 : vector<16xf32> to vector<1x16xf32>
    %cst_6 = arith.constant 1.000000e-24 : f32
    %10 = vector.broadcast %cst_6 : f32 to vector<1x16xf32>
    %11 = arith.maximumf %9, %10 : vector<1x16xf32>
    %12 = math.rsqrt %11 : vector<1x16xf32>
    %cst_7 = arith.constant dense<0.000000e+00> : vector<16x16xf32>
    %13 = tpu.matmul %3, %4, %cst_7 {dimension_numbers = #tpu.dot_dimension_numbers<[1], [0], [0], [1], [0, 0, 1, 1], [], []>} : vector<16x32xbf16>, vector<32x16xbf16>, vector<16x16xf32> -> vector<16x16xf32>
    %14 = vector.broadcast %12 : vector<1x16xf32> to vector<16x16xf32>
    %15 = arith.mulf %13, %14 : vector<16x16xf32>
    %16 = tpu.iota {dimensions = array<i32: 1>} : vector<1x16xi32>
    %c16_i32 = arith.constant 16 : i32
    %17 = arith.muli %arg0, %c16_i32 : i32
    %18 = vector.broadcast %17 : i32 to vector<1x16xi32>
    %19 = arith.addi %16, %18 : vector<1x16xi32>
    %cst_8 = arith.constant dense<0xFF800000> : vector<16xf32>
    %20 = vector.multi_reduction <maximumf>, %15, %cst_8 [1] : vector<16x16xf32> to vector<16xf32>
    %21 = vector.shape_cast %20 : vector<16xf32> to vector<16x1xf32>
    %c0_9 = arith.constant 0 : index
    %c0_10 = arith.constant 0 : index
    %22 = vector.load %arg6[%c0_9, %c0_10] : memref<16x1xf32, #tpu.memory_space<vmem>>, vector<16x1xf32>
    %23 = arith.maximumf %22, %21 : vector<16x1xf32>
    %c0_11 = arith.constant 0 : index
    %c0_12 = arith.constant 0 : index
    %24 = vector.load %arg7[%c0_11, %c0_12] : memref<16x1xf32, #tpu.memory_space<vmem>>, vector<16x1xf32>
    %c0_13 = arith.constant 0 : index
    %c0_14 = arith.constant 0 : index
    %25 = vector.load %arg6[%c0_13, %c0_14] : memref<16x1xf32, #tpu.memory_space<vmem>>, vector<16x1xf32>
    %26 = arith.subf %25, %23 : vector<16x1xf32>
    %27 = math.exp %26 : vector<16x1xf32>
    %28 = arith.mulf %24, %27 : vector<16x1xf32>
    %29 = vector.broadcast %23 : vector<16x1xf32> to vector<16x16xf32>
    %30 = arith.subf %15, %29 : vector<16x16xf32>
    %31 = math.exp %30 : vector<16x16xf32>
    %cst_15 = arith.constant dense<0.000000e+00> : vector<16xf32>
    %32 = vector.multi_reduction <add>, %31, %cst_15 [1] : vector<16x16xf32> to vector<16xf32>
    %33 = vector.shape_cast %32 : vector<16xf32> to vector<16x1xf32>
    %34 = arith.addf %28, %33 : vector<16x1xf32>
    %c0_16 = arith.constant 0 : index
    %c0_17 = arith.constant 0 : index
    %35 = vector.load %arg7[%c0_16, %c0_17] : memref<16x1xf32, #tpu.memory_space<vmem>>, vector<16x1xf32>
    tpu.vector_store %arg7[%c0_16, %c0_17], %34 {strides = array<i32>} : memref<16x1xf32, #tpu.memory_space<vmem>>, vector<16x1xf32>,
    %c0_18 = arith.constant 0 : index
    %c0_19 = arith.constant 0 : index
    %36 = vector.load %arg6[%c0_18, %c0_19] : memref<16x1xf32, #tpu.memory_space<vmem>>, vector<16x1xf32>
    tpu.vector_store %arg6[%c0_18, %c0_19], %23 {strides = array<i32>} : memref<16x1xf32, #tpu.memory_space<vmem>>, vector<16x1xf32>,
    %37 = vector.extract_strided_slice %15 {offsets = [0, 0], sizes = [8, 16], strides = [1, 1]} : vector<16x16xf32> to vector<8x16xf32>
    %38 = vector.extract_strided_slice %15 {offsets = [8, 0], sizes = [8, 16], strides = [1, 1]} : vector<16x16xf32> to vector<8x16xf32>
    %39 = arith.addf %37, %38 : vector<8x16xf32>
    %40 = vector.broadcast %19 : vector<1x16xi32> to vector<8x16xi32>
    %41 = vector.broadcast %5 : vector<8x1xi32> to vector<8x16xi32>
    %42 = arith.cmpi eq, %40, %41 : vector<8x16xi32>
    %c0_20 = arith.constant 0 : index
    %c0_21 = arith.constant 0 : index
    %43 = vector.load %arg8[%c0_20, %c0_21] : memref<8x1xf32, #tpu.memory_space<vmem>>, vector<8x1xf32>
    %cst_22 = arith.constant 0.000000e+00 : f32
    %44 = vector.broadcast %cst_22 : f32 to vector<8x16xf32>
    %45 = arith.select %42, %39, %44 : vector<8x16xi1>, vector<8x16xf32>
    %cst_23 = arith.constant dense<0.000000e+00> : vector<8xf32>
    %46 = vector.multi_reduction <add>, %45, %cst_23 [1] : vector<8x16xf32> to vector<8xf32>
    %47 = vector.shape_cast %46 : vector<8xf32> to vector<8x1xf32>
    %cst_24 = arith.constant 0.899999976 : f32
    %48 = vector.broadcast %cst_24 : f32 to vector<8x1xf32>
    %49 = arith.mulf %48, %47 : vector<8x1xf32>
    %cst_25 = arith.constant dense<0.000000e+00> : vector<8xf32>
    %50 = vector.multi_reduction <add>, %39, %cst_25 [1] : vector<8x16xf32> to vector<8xf32>
    %51 = vector.shape_cast %50 : vector<8xf32> to vector<8x1xf32>
    %cst_26 = arith.constant 6.250000e-03 : f32
    %52 = vector.broadcast %cst_26 : f32 to vector<8x1xf32>
    %53 = arith.mulf %52, %51 : vector<8x1xf32>
    %54 = arith.addf %49, %53 : vector<8x1xf32>
    %55 = arith.addf %43, %54 : vector<8x1xf32>
    %c0_27 = arith.constant 0 : index
    %c0_28 = arith.constant 0 : index
    %56 = vector.load %arg8[%c0_27, %c0_28] : memref<8x1xf32, #tpu.memory_space<vmem>>, vector<8x1xf32>
    tpu.vector_store %arg8[%c0_27, %c0_28], %55 {strides = array<i32>} : memref<8x1xf32, #tpu.memory_space<vmem>>, vector<8x1xf32>,
    %c0_i32_29 = arith.constant 0 : i32
    %57 = arith.cmpi eq, %arg0, %c0_i32_29 : i32
    %58 = arith.extui %57 : i1 to i32
    %c0_i32_30 = arith.constant 0 : i32
    %59 = arith.cmpi ne, %58, %c0_i32_30 : i32
    scf.if %59 {
      %c0_31 = arith.constant 0 : index
      %c0_32 = arith.constant 0 : index
      %60 = vector.load %arg6[%c0_31, %c0_32] : memref<16x1xf32, #tpu.memory_space<vmem>>, vector<16x1xf32>
      %c0_33 = arith.constant 0 : index
      %c0_34 = arith.constant 0 : index
      %61 = vector.load %arg7[%c0_33, %c0_34] : memref<16x1xf32, #tpu.memory_space<vmem>>, vector<16x1xf32>
      %62 = math.log %61 : vector<16x1xf32>
      %63 = arith.addf %60, %62 : vector<16x1xf32>
      %64 = vector.shape_cast %63 : vector<16x1xf32> to vector<1x16x1xf32>
      %cst_35 = arith.constant dense<0.000000e+00> : vector<1xf32>
      %65 = vector.multi_reduction <add>, %64, %cst_35 [1, 2] : vector<1x16x1xf32> to vector<1xf32>
      %66 = vector.shape_cast %65 : vector<1xf32> to vector<1x1x1xf32>
      %67 = vector.extract %66[0, 0, 0] : f32 from vector<1x1x1xf32>
      %c0_36 = arith.constant 0 : index
      %c0_37 = arith.constant 0 : index
      %68 = vector.load %arg8[%c0_36, %c0_37] : memref<8x1xf32, #tpu.memory_space<vmem>>, vector<8x1xf32>
      %69 = vector.shape_cast %68 : vector<8x1xf32> to vector<1x8x1xf32>
      %cst_38 = arith.constant dense<0.000000e+00> : vector<1xf32>
      %70 = vector.multi_reduction <add>, %69, %cst_38 [1, 2] : vector<1x8x1xf32> to vector<1xf32>
      %71 = vector.shape_cast %70 : vector<1xf32> to vector<1x1x1xf32>
      %72 = vector.extract %71[0, 0, 0] : f32 from vector<1x1x1xf32>
      %73 = arith.subf %67, %72 : f32
      %cst_39 = arith.constant 8.000000e+00 : f32
      %74 = arith.divf %73, %cst_39 : f32
      %75 = arith.extf %3 : vector<16x32xbf16> to vector<16x32xf32>
      %76 = arith.mulf %75, %75 : vector<16x32xf32>
      %cst_40 = arith.constant dense<0.000000e+00> : vector<16xf32>
      %77 = vector.multi_reduction <add>, %76, %cst_40 [1] : vector<16x32xf32> to vector<16xf32>
      %78 = vector.shape_cast %77 : vector<16xf32> to vector<16x1xf32>
      %cst_41 = arith.constant 1.000000e-24 : f32
      %79 = vector.broadcast %cst_41 : f32 to vector<16x1xf32>
      %80 = arith.maximumf %78, %79 : vector<16x1xf32>
      %81 = math.rsqrt %80 : vector<16x1xf32>
      %82 = vector.broadcast %81 : vector<16x1xf32> to vector<16x32xf32>
      %83 = arith.mulf %75, %82 : vector<16x32xf32>
      %84 = vector.extract_strided_slice %83 {offsets = [0, 0], sizes = [8, 32], strides = [1, 1]} : vector<16x32xf32> to vector<8x32xf32>
      %85 = arith.truncf %84 : vector<8x32xf32> to vector<8x32xbf16>
      %86 = vector.extract_strided_slice %83 {offsets = [8, 0], sizes = [8, 32], strides = [1, 1]} : vector<16x32xf32> to vector<8x32xf32>
      %87 = arith.truncf %86 : vector<8x32xf32> to vector<8x32xbf16>
      %cst_42 = arith.constant dense<0.000000e+00> : vector<8x8xf32>
      %88 = tpu.matmul %85, %87, %cst_42 {dimension_numbers = #tpu.dot_dimension_numbers<[1], [1], [0], [0], [0, 0, 1, 0], [], []>} : vector<8x32xbf16>, vector<8x32xbf16>, vector<8x8xf32> -> vector<8x8xf32>
      %c0_43 = arith.constant 0 : index
      %c0_44 = arith.constant 0 : index
      %89 = vector.load %arg4[%c0_43, %c0_44] : memref<1x8xi32, #tpu.memory_space<vmem>>, vector<1x8xi32>
      %90 = vector.broadcast %5 : vector<8x1xi32> to vector<8x8xi32>
      %91 = vector.broadcast %89 : vector<1x8xi32> to vector<8x8xi32>
      %92 = arith.cmpi eq, %90, %91 : vector<8x8xi32>
      %cst_45 = arith.constant 6.000000e-01 : f32
      %93 = vector.broadcast %cst_45 : f32 to vector<8x8xf32>
      %94 = arith.subf %88, %93 : vector<8x8xf32>
      %cst_46 = arith.constant -1.000000e+01 : f32
      %95 = vector.broadcast %cst_46 : f32 to vector<8x8xf32>
      %96 = arith.mulf %95, %94 : vector<8x8xf32>
      %cst_47 = arith.constant 4.000000e-01 : f32
      %97 = vector.broadcast %cst_47 : f32 to vector<8x8xf32>
      %98 = arith.subf %88, %97 : vector<8x8xf32>
      %cst_48 = arith.constant 4.000000e+01 : f32
      %99 = vector.broadcast %cst_48 : f32 to vector<8x8xf32>
      %100 = arith.mulf %99, %98 : vector<8x8xf32>
      %101 = arith.select %92, %96, %100 : vector<8x8xi1>, vector<8x8xf32>
      %cst_49 = arith.constant 0.000000e+00 : f32
      %102 = vector.broadcast %cst_49 : f32 to vector<8x8xf32>
      %103 = arith.maximumf %101, %102 : vector<8x8xf32>
      %104 = math.absf %101 : vector<8x8xf32>
      %cst_50 = arith.constant 0.000000e+00 : f32
      %105 = vector.broadcast %cst_50 : f32 to vector<8x8xf32>
      %106 = arith.subf %105, %104 : vector<8x8xf32>
      %107 = math.exp %106 : vector<8x8xf32>
      %cst_51 = arith.constant 1.000000e+00 : f32
      %108 = vector.broadcast %cst_51 : f32 to vector<8x8xf32>
      %109 = arith.addf %108, %107 : vector<8x8xf32>
      %110 = math.log %109 : vector<8x8xf32>
      %111 = arith.addf %103, %110 : vector<8x8xf32>
      %112 = vector.shape_cast %111 : vector<8x8xf32> to vector<1x8x8xf32>
      %cst_52 = arith.constant dense<0.000000e+00> : vector<1xf32>
      %113 = vector.multi_reduction <add>, %112, %cst_52 [1, 2] : vector<1x8x8xf32> to vector<1xf32>
      %114 = vector.shape_cast %113 : vector<1xf32> to vector<1x1x1xf32>
      %115 = vector.extract %114[0, 0, 0] : f32 from vector<1x1x1xf32>
      %cst_53 = arith.constant 2.500000e-01 : f32
      %116 = arith.mulf %115, %cst_53 : f32
      %117 = tpu.iota {dimensions = array<i32: 1>} : vector<1x2xi32>
      %c0_i32_54 = arith.constant 0 : i32
      %118 = vector.broadcast %c0_i32_54 : i32 to vector<1x2xi32>
      %119 = arith.cmpi eq, %117, %118 : vector<1x2xi32>
      %120 = vector.broadcast %74 : f32 to vector<1x2xf32>
      %121 = vector.broadcast %116 : f32 to vector<1x2xf32>
      %122 = arith.select %119, %120, %121 : vector<1x2xi1>, vector<1x2xf32>
      %c0_55 = arith.constant 0 : index
      %c0_56 = arith.constant 0 : index
      %123 = vector.load %arg5[%c0_55, %c0_56] : memref<1x2xf32, #tpu.memory_space<vmem>>, vector<1x2xf32>
      tpu.vector_store %arg5[%c0_55, %c0_56], %122 {strides = array<i32>} : memref<1x2xf32, #tpu.memory_space<vmem>>, vector<1x2xf32>,
    } else {
    }
    return
  }
  func.func @transform_0(%arg0: i32) -> (i32, i32) {
    %c0_i32 = arith.constant 0 : i32
    %c0_i32_0 = arith.constant 0 : i32
    %c0_i32_1 = arith.constant 0 : i32
    return %c0_i32, %c0_i32_0 : i32, i32
  }
  func.func @transform_1(%arg0: i32) -> (i32, i32) {
    %c0_i32 = arith.constant 0 : i32
    %c0_i32_0 = arith.constant 0 : i32
    return %c0_i32, %arg0 : i32, i32
  }
  func.func @transform_2(%arg0: i32) -> (i32, i32) {
    %c0_i32 = arith.constant 0 : i32
    %c0_i32_0 = arith.constant 0 : i32
    %c0_i32_1 = arith.constant 0 : i32
    return %c0_i32, %c0_i32_0 : i32, i32
  }
  func.func @transform_3(%arg0: i32) -> (i32, i32) {
    %c0_i32 = arith.constant 0 : i32
    %c0_i32_0 = arith.constant 0 : i32
    %c0_i32_1 = arith.constant 0 : i32
    return %c0_i32, %c0_i32_0 : i32, i32
  }
  func.func @transform_4(%arg0: i32) -> (i32, i32) {
    %c0_i32 = arith.constant 0 : i32
    %c0_i32_0 = arith.constant 0 : i32
    %c0_i32_1 = arith.constant 0 : i32
    return %c0_i32, %c0_i32_0 : i32, i32
  }
}

</mosaic_0001>

<llo_original>
// kernel: tpu_custom_call.1
$region0: #{tpu_custom_call.1}
  #allocation0 [shape = 'u32[]', space=smem, size = 0x4, offset = 0x4, fixed_abs, tag = 'smem constant byte address 0x4 - core index']
  #allocation1 [shape = 'u32[144,128]{1,0:T(1,128)}', space=vmem, size = 0x12000, scoped, tag = 'internal scratch']
  #allocation2 [shape = 'f32[16,1]{1,0:T(8,128)}', space=vmem, size = 0x2000, scoped, tag = 'scratch operand']
  #allocation3 [shape = 'f32[16,1]{1,0:T(8,128)}', space=vmem, size = 0x2000, scoped, tag = 'scratch operand']
  #allocation4 [shape = 'f32[8,1]{1,0:T(8,128)}', space=vmem, size = 0x1000, scoped, tag = 'scratch operand']
  %s0 = inlined_call_operand.vmem [shape: bf16[16,32], index: 0, kind: input, shape index: {}]
  %s1 = inlined_call_operand.vmem [shape: bf16[32,16], index: 1, kind: input, shape index: {}]
  %s2 = inlined_call_operand.vmem [shape: s32[8,1], index: 2, kind: input, shape index: {}]
  %s3 = inlined_call_operand.vmem [shape: s32[1,8], index: 3, kind: input, shape index: {}]
  %s4 = inlined_call_operand.hbm [shape: f32[1,2], index: 4, kind: output, shape index: {}]
  %s5 = sld [smem:[#allocation0]]
  $region34: #{tpu_custom_call.1} parent=0
    _
  %s7 = ssub.s32 1, %s5
  %s8 = scalar_select 0, %s7, %s5
  $region1: #{tpu_custom_call.1} parent=0
    #allocation5 [shape = 'u8[512]{0}', space=vmem, size = 0x400, scoped, tag = 'output window, operand 0, single buffered']
    #allocation6 [shape = 's32[1]{0}', space=sflag, size = 0x4, scoped, tag = 'scoped memory for tpu_custom_call.1']
    %9 = vsyncpa [#allocation6], 0
    // Predicated region
    $region2: #{tpu_custom_call.1} parent=1 // pred_check
      _
    $region3: #{tpu_custom_call.1} parent=1 // pred_check_branch
      %11 = sbr.rel (0) target = $region5
    $region4: #{tpu_custom_call.1} parent=1 // pred_region
      _
    $region5: #{tpu_custom_call.1} parent=1 // pred_fallthru
      _
    // Predicated region
    $region6: #{tpu_custom_call.1} parent=1 // pred_check
      _
    $region7: #{tpu_custom_call.1} parent=1 // pred_check_branch
      %13 = sbr.rel (0) target = $region9
    $region8: #{tpu_custom_call.1} parent=1 // pred_region
      _
    $region9: #{tpu_custom_call.1} parent=1 // pred_fallthru
      _
    // Predicated region
    $region10: #{tpu_custom_call.1} parent=1 // pred_check
      _
    $region11: #{tpu_custom_call.1} parent=1 // pred_check_branch
      %15 = sbr.rel (0) target = $region13
    $region12: #{tpu_custom_call.1} parent=1 // pred_region
      _
    $region13: #{tpu_custom_call.1} parent=1 // pred_fallthru
      _
    // Predicated region
    $region14: #{tpu_custom_call.1} parent=1 // pred_check
      _
    $region15: #{tpu_custom_call.1} parent=1 // pred_check_branch
      %17 = sbr.rel (0) target = $region17
    $region16: #{tpu_custom_call.1} parent=1 // pred_region
      _
    $region17: #{tpu_custom_call.1} parent=1 // pred_fallthru
      _
    %p19 = scmp.eq.s32.totalorder 0, 0
    // Predicated region
    $region18: #{tpu_custom_call.1} parent=1 // pred_check
      %p20 = pneg %p19
    $region19: #{tpu_custom_call.1} parent=1 // pred_check_branch
      %22 = sbr.rel (%p20) target = $region21
    $region20: #{tpu_custom_call.1} parent=1 // pred_region
      %vm23 = vcmask 7168
      %24 = vst.msk [vmem:[#allocation2] sm:$0xff] %vm23, -inf
      %25 = vst.msk [vmem:[#allocation2 + $0x8] sm:$0xff] %vm23, -inf
      %26 = vst.msk [vmem:[#allocation3] sm:$0xff] %vm23, 0.0
      %27 = vst.msk [vmem:[#allocation3 + $0x8] sm:$0xff] %vm23, 0.0
      %28 = vst.msk [vmem:[#allocation4] sm:$0xff] %vm23, 0.0
    $region21: #{tpu_custom_call.1} parent=1 // pred_fallthru
      _
    %v29 = vld [vmem:[%s0] sm:$0xf]
    %v30 = vld [vmem:[%s0 + $0x4] sm:$0xf]
    %v31 = vld [vmem:[%s1] sm:$0xf]
    %v32 = vld [vmem:[%s1 + $0x4] sm:$0xf]
    %v33 = vld [vmem:[%s1 + $0x8] sm:$0xf]
    %v34 = vld [vmem:[%s1 + $0xc] sm:$0xf]
    %v35 = vld [vmem:[%s2] sm:$0xff]
    %v36 = vunpack.c.l.bf16 %v31
    %v37 = vunpack.c.l.bf16 %v32
    %v38 = vunpack.c.l.bf16 %v33
    %v39 = vunpack.c.l.bf16 %v34
    %v40 = vmul.f32 %v36, %v36
    %v41 = vmul.f32 %v37, %v37
    %v42 = vmul.f32 %v38, %v38
    %v43 = vmul.f32 %v39, %v39
    %vm44 = vcmask 130048
    %v45 = vsel %vm44, %v40, 0.0
    %v46 = vsel %vm44, %v41, 0.0
    %v47 = vadd.f32 %v45, %v46
    %v48 = vsel %vm44, %v42, 0.0
    %v49 = vadd.f32 %v47, %v48
    %v50 = vsel %vm44, %v43, 0.0
    %v51 = vadd.f32 %v49, %v50
    %v52 = vrot.slane %v51, 4
    %v53 = vadd.f32 %v51, %v52
    %v54 = vrot.slane %v53, 2
    %v55 = vadd.f32 %v53, %v54
    %v56 = vrot.slane %v55, 1
    %v57 = vadd.f32 %v55, %v56
    %v58 = vmax.f32 %v57, 1e-24
    %v59 = vrsqrt.pop %v58
    %v62 = vunpack.c.l.b16 %v29
    %v63 = vunpack.c.l.b16 %v30
    %v64 = vpack.c.b16 %v63, %v62
    %v69 = vunpack.c.l.b16 %v31
    %v70 = vunpack.c.l.b16 %v32
    %v71 = vunpack.c.l.b16 %v33
    %v72 = vunpack.c.l.b16 %v34
    %v73 = vpack.c.b16 %v70, %v69
    %v74 = vpack.c.b16 %v72, %v71
    %vm77 = vcmask 261120
    %v79 = vsel %vm77, %v64, 0
    %81 = vmatprep.subr.bf16.mxu0 0
    %82 = vmatpush1.bf16.msra.mxu0 0
    %83 = vmatprep.subr.bf16.mxu0 0
    %84 = vmatpush1.bf16.msra.mxu0 0
    %85 = vmatprep.subr.bf16.mxu0 0
    %86 = vmatpush1.bf16.msra.mxu0 0
    %87 = vmatprep.subr.bf16.mxu0 0
    %88 = vmatpush1.bf16.msra.mxu0 0
    %89 = vmatprep.subr.bf16.mxu0 0
    %90 = vmatpush1.bf16.msra.mxu0 0
    %91 = vmatprep.subr.bf16.mxu0 0
    %92 = vmatpush1.bf16.msra.mxu0 0
    %93 = vmatprep.subr.bf16.mxu0 0
    %94 = vmatpush1.bf16.msra.mxu0 %v74
    %95 = vmatprep.subr.bf16.mxu0 0
    %96 = vmatpush1.bf16.msra.mxu0 %v73
    %97 = vmatprep.subr.bf16.mxu0 0
    %98 = vmatpush2.bf16.msra.mxu0 0
    %99 = vmatprep.subr.bf16.mxu0 0
    %100 = vmatpush2.bf16.msra.mxu0 0
    %101 = vmatprep.subr.bf16.mxu0 0
    %102 = vmatpush2.bf16.msra.mxu0 0
    %103 = vmatprep.subr.bf16.mxu0 0
    %104 = vmatpush2.bf16.msra.mxu0 0
    %105 = vmatprep.subr.bf16.mxu0 0
    %106 = vmatpush2.bf16.msra.mxu0 0
    %107 = vmatprep.subr.bf16.mxu0 0
    %108 = vmatpush2.bf16.msra.mxu0 0
    %109 = vmatprep.subr.bf16.mxu0 0
    %110 = vmatpush2.bf16.msra.mxu0 0
    %111 = vmatprep.subr.bf16.mxu0 0
    %112 = vmatpush2.bf16.msra.mxu0 0
    %113 = vmatprep.mubr.bf16.mxu0 0
    %114 = vmatmul.mubr.bf16.gmra.mxu0 %v79
    %v115 = vpop.f32.mrf.mxu0
    %v116 = vadd.f32 0.0, %v115
    %v117 = vpop.f32.mrf.mxu0
    %v118 = vpop.f32.mrf.mxu0
    %v119 = vadd.f32 0.0, %v118
    %v120 = vpop.f32.mrf.mxu0
    %121 = vdwg.mxu0
    %v122 = vmul.f32 %v116, %v59
    %v123 = vmul.f32 %v119, %v59
    %v124 = vlaneseq
    %v125 = vand.u32 %v124, 127
    %s126 = smul.u32 0, 16
    %v127 = vstv %s126
    %v128 = vadd.s32 %v125, %v127
    %v129 = vsel %vm44, %v122, -inf
    %130 = vmax.xlane.f32.xlu0 %v129
    %v131 = vpop.xlane.xlu0 %130
    %v132 = vsel %vm44, %v123, -inf
    %133 = vmax.xlane.f32.xlu0 %v132
    %v134 = vpop.xlane.xlu0 %133
    %v135 = vld [vmem:[#allocation2] sm:$0xff]
    %v136 = vld [vmem:[#allocation2 + $0x8] sm:$0xff]
    %v137 = vmax.f32 %v135, %v131
    %v138 = vmax.f32 %v136, %v134
    %v139 = vld [vmem:[#allocation3] sm:$0xff]
    %v140 = vld [vmem:[#allocation3 + $0x8] sm:$0xff]
    %v141 = vsub.f32 %v135, %v137
    %v142 = vsub.f32 %v136, %v138
    %v143 = vmul.f32 %v141, 1.442695
    %v144 = vpow.pop %v143
    %v145 = vmul.f32 %v142, 1.442695
    %v146 = vpow.pop %v145
    %v147 = vmul.f32 %v139, %v144
    %v148 = vmul.f32 %v140, %v146
    %150 = vset.pattern.permute.xlu0 0
    %151 = vperm.xlu0 %150, %v137
    %v152 = vpop.permute.xlu0 %151
    %155 = vset.pattern.permute.xlu0 0
    %156 = vperm.xlu0 %155, %v138
    %v157 = vpop.permute.xlu0 %156
    %v159 = vsub.f32 %v122, %v152
    %v160 = vsub.f32 %v123, %v157
    %v161 = vmul.f32 %v159, 1.442695
    %v162 = vpow.pop %v161
    %v163 = vmul.f32 %v160, 1.442695
    %v164 = vpow.pop %v163
    %v165 = vsel %vm44, %v162, 0.0
    %166 = vadd.xlane.f32.xlu0 %v165
    %v167 = vpop.xlane.xlu0 %166
    %v168 = vsel %vm44, %v164, 0.0
    %169 = vadd.xlane.f32.xlu0 %v168
    %v170 = vpop.xlane.xlu0 %169
    %v171 = vadd.f32 %v147, %v167
    %v172 = vadd.f32 %v148, %v170
    %vm173 = vcmask 7168
    %174 = vst.msk [vmem:[#allocation3] sm:$0xff] %vm173, %v171
    %175 = vst.msk [vmem:[#allocation3 + $0x8] sm:$0xff] %vm173, %v172
    %176 = vst.msk [vmem:[#allocation2] sm:$0xff] %vm173, %v137
    %177 = vst.msk [vmem:[#allocation2 + $0x8] sm:$0xff] %vm173, %v138
    %v178 = vadd.f32 %v122, %v123
    %179 = vset.pattern.permute.xlu0 0
    %180 = vperm.xlu0 %179, %v35
    %v181 = vpop.permute.xlu0 %180
    %vm182 = vcmp.eq.s32.totalorder %v128, %v181
    %v183 = vld [vmem:[#allocation4] sm:$0xff]
    %v184 = vsel %vm182, %v178, 0.0
    %v185 = vsel %vm44, %v184, 0.0
    %186 = vadd.xlane.f32.xlu0 %v185
    %v187 = vpop.xlane.xlu0 %186
    %v188 = vmul.f32 %v187, 0.9
    %v189 = vsel %vm44, %v178, 0.0
    %190 = vadd.xlane.f32.xlu0 %v189
    %v191 = vpop.xlane.xlu0 %190
    %v192 = vmul.f32 %v191, 0.00625
    %v193 = vadd.f32 %v188, %v192
    %v194 = vadd.f32 %v183, %v193
    %195 = vst.msk [vmem:[#allocation4] sm:$0xff] %vm173, %v194
    // Predicated region
    $region22: #{tpu_custom_call.1} parent=1 // pred_check
      %p196 = pneg %p19
    $region23: #{tpu_custom_call.1} parent=1 // pred_check_branch
      %198 = sbr.rel (%p196) target = $region25
    $region24: #{tpu_custom_call.1} parent=1 // pred_region
      %v199 = vld [vmem:[#allocation2] sm:$0xff]
      %v200 = vld [vmem:[#allocation2 + $0x8] sm:$0xff]
      %v201 = vld [vmem:[#allocation3] sm:$0xff]
      %v202 = vld [vmem:[#allocation3 + $0x8] sm:$0xff]
      %v203 = vlog2.pop %v201
      %v204 = vmul.f32 %v203, 0.6931472
      %v205 = vlog2.pop %v202
      %v206 = vmul.f32 %v205, 0.6931472
      %v207 = vadd.f32 %v199, %v204
      %v208 = vadd.f32 %v200, %v206
      %v209 = vsel %vm173, %v207, 0.0
      %v210 = vsel %vm173, %v208, 0.0
      %v211 = vadd.f32 %v209, %v210
      %212 = vadd.xlane.f32.xlu0 %v211
      %v213 = vpop.xlane.xlu0 %212
      %v214 = vrot.slane %v213, 4
      %v215 = vadd.f32 %v213, %v214
      %v216 = vrot.slane %v215, 2
      %v217 = vadd.f32 %v215, %v216
      %v218 = vrot.slane %v217, 1
      %v219 = vadd.f32 %v217, %v218
      %s220 = vtos %v219
      %v221 = vld [vmem:[#allocation4] sm:$0xff]
      %v222 = vsel %vm173, %v221, 0.0
      %223 = vadd.xlane.f32.xlu0 %v222
      %v224 = vpop.xlane.xlu0 %223
      %v225 = vrot.slane %v224, 4
      %v226 = vadd.f32 %v224, %v225
      %v227 = vrot.slane %v226, 2
      %v228 = vadd.f32 %v226, %v227
      %v229 = vrot.slane %v228, 1
      %v230 = vadd.f32 %v228, %v229
      %s231 = vtos %v230
      %s232 = ssub.f32 %s220, %s231
      %v233 = vrcp.pop 8.0
      %s234 = vtos %v233
      %s235 = smul.f32 %s232, %s234
      %v236 = vunpack.c.l.bf16 %v29
      %v237 = vunpack.c.l.bf16 %v30
      %v238 = vmul.f32 %v236, %v236
      %v239 = vmul.f32 %v237, %v237
      %v240 = vsel %vm77, %v238, 0.0
      %241 = vadd.xlane.f32.xlu0 %v240
      %v242 = vpop.xlane.xlu0 %241
      %v243 = vsel %vm77, %v239, 0.0
      %244 = vadd.xlane.f32.xlu0 %v243
      %v245 = vpop.xlane.xlu0 %244
      %v246 = vmax.f32 %v242, 1e-24
      %v247 = vmax.f32 %v245, 1e-24
      %v248 = vrsqrt.pop %v246
      %v249 = vrsqrt.pop %v247
      %v250 = vmul.f32 %v236, %v248
      %v251 = vmul.f32 %v237, %v249
      %v252 = vpack.c.bf16 %v250, %v250
      %v253 = vpack.c.bf16 %v251, %v251
      %v255 = vsel %vm77, %v252, 0
      %v258 = vsel %vm77, %v253, 0
      %260 = vmatprep.subr.bf16.mxu0 0
      %261 = vmatpush1.bf16.xpose.msra.mxu0 0
      %262 = vmatprep.subr.bf16.mxu0 0
      %263 = vmatpush1.bf16.xpose.msra.mxu0 0
      %264 = vmatprep.subr.bf16.mxu0 0
      %265 = vmatpush1.bf16.xpose.msra.mxu0 0
      %266 = vmatprep.subr.bf16.mxu0 0
      %267 = vmatpush1.bf16.xpose.msra.mxu0 0
      %268 = vmatprep.subr.bf16.mxu0 0
      %269 = vmatpush1.bf16.xpose.msra.mxu0 0
      %270 = vmatprep.subr.bf16.mxu0 0
      %271 = vmatpush1.bf16.xpose.msra.mxu0 0
      %272 = vmatprep.subr.bf16.mxu0 0
      %273 = vmatpush1.bf16.xpose.msra.mxu0 0
      %274 = vmatprep.subr.bf16.mxu0 0
      %275 = vmatpush1.bf16.xpose.msra.mxu0 %v258
      %276 = vmatprep.subr.bf16.mxu0 0
      %277 = vmatpush2.bf16.xpose.msra.mxu0 0
      %278 = vmatprep.subr.bf16.mxu0 0
      %279 = vmatpush2.bf16.xpose.msra.mxu0 0
      %280 = vmatprep.subr.bf16.mxu0 0
      %281 = vmatpush2.bf16.xpose.msra.mxu0 0
      %282 = vmatprep.subr.bf16.mxu0 0
      %283 = vmatpush2.bf16.xpose.msra.mxu0 0
      %284 = vmatprep.subr.bf16.mxu0 0
      %285 = vmatpush2.bf16.xpose.msra.mxu0 0
      %286 = vmatprep.subr.bf16.mxu0 0
      %287 = vmatpush2.bf16.xpose.msra.mxu0 0
      %288 = vmatprep.subr.bf16.mxu0 0
      %289 = vmatpush2.bf16.xpose.msra.mxu0 0
      %290 = vmatprep.subr.bf16.mxu0 0
      %291 = vmatpush2.bf16.xpose.msra.mxu0 0
      %292 = vmatprep.mubr.bf16.mxu0 0
      %293 = vmatmul.mubr.bf16.gmra.mxu0 %v255
      %v294 = vpop.f32.mrf.mxu0
      %v295 = vadd.f32 0.0, %v294
      %v296 = vpop.f32.mrf.mxu0
      %v297 = vpop.f32.mrf.mxu0
      %v298 = vpop.f32.mrf.mxu0
      %299 = vdwg.mxu0
      %v300 = vld [vmem:[%s3] sm:$0x1]
      %v301 = vlaneseq
      %v302 = vshrl.u32 %v301, 7
      %v303 = vsub.s32 0, %v302
      %v304 = vrot.slane %v300, %v303
      %vm305 = vcmp.eq.s32.totalorder %v181, %v304
      %v306 = vsub.f32 %v295, 0.6
      %v307 = vmul.f32 %v306, -10.0
      %v308 = vsub.f32 %v295, 0.4
      %v309 = vmul.f32 %v308, 40.0
      %v310 = vsel %vm305, %v307, %v309
      %v311 = vmax.f32 %v310, 0.0
      %v312 = vand.u32 2147483647, %v310
      %v313 = vsub.f32 0.0, %v312
      %v314 = vmul.f32 %v313, 1.442695
      %v315 = vpow.pop %v314
      %v316 = vadd.f32 %v315, 1.0
      %v317 = vlog2.pop %v316
      %v318 = vmul.f32 %v317, 0.6931472
      %v319 = vadd.f32 %v311, %v318
      %vm320 = vcmask 64512
      %v321 = vsel %vm320, %v319, 0.0
      %322 = vadd.xlane.f32.xlu0 %v321
      %v323 = vpop.xlane.xlu0 %322
      %v324 = vrot.slane %v323, 4
      %v325 = vadd.f32 %v323, %v324
      %v326 = vrot.slane %v325, 2
      %v327 = vadd.f32 %v325, %v326
      %v328 = vrot.slane %v327, 1
      %v329 = vadd.f32 %v327, %v328
      %s330 = vtos %v329
      %s331 = smul.f32 %s330, 0.25
      %vm332 = vcmp.eq.s32.totalorder %v125, 0
      %v333 = vstv %s235
      %v334 = vstv %s331
      %v335 = vsel %vm332, %v333, %v334
      %vm336 = vcmask 8192
      %337 = vst.msk [vmem:[#allocation5] sm:$0x1] %vm336, %v335
    $region25: #{tpu_custom_call.1} parent=1 // pred_fallthru
      _
    // Predicated region
    $region26: #{tpu_custom_call.1} parent=1 // pred_check
      _
    $region27: #{tpu_custom_call.1} parent=1 // pred_check_branch
      %339 = sbr.rel (0) target = $region29
    $region28: #{tpu_custom_call.1} parent=1 // pred_region
      %s341 = ssub.s32 16, 16
      %342 = vsyncadd [#allocation6], %s341
      %s344 = sshll.u32 [#allocation5], 4
      %s345 = int_to_ptr.vmem [resolvable:$true] %s344
      %347 = dma.vmem_to_hbm [thread:$0]  %s345, 16, %s4, [#allocation6]
    $region29: #{tpu_custom_call.1} parent=1 // pred_fallthru
      _
    // Predicated region
    $region30: #{tpu_custom_call.1} parent=1 // pred_check
      _
    $region31: #{tpu_custom_call.1} parent=1 // pred_check_branch
      %349 = sbr.rel (0) target = $region33
    $region32: #{tpu_custom_call.1} parent=1 // pred_region
      %350 = dma.done [#allocation6], 16
    $region33: #{tpu_custom_call.1} parent=1 // pred_fallthru
      _
    %351 = vsyncpa [#allocation6], 1

</llo_original>
